<compile_context>
chip_gen: v7x
topology: tpu7x:2x2x1
jax: 0.10.0
libtpu: 0.0.40
codegen_flags: <defaults>
</compile_context>

<pallas_src>
import jax
import jax.numpy as jnp
from jax.experimental import pallas as pl
from jax.experimental.pallas import tpu as pltpu


def _identity_kernel(x_ref, o_ref):
    # Pure pass-through: load the whole (small) array from VMEM, store it back.
    o_ref[...] = x_ref[...]


def test_model_forward(x, y, params):
    """Mirrors TestModel.forward(x, y): returns x unchanged.

    `y` and `params` (the Linear(10,1) weight/bias) are accepted but unused,
    exactly as in the reference forward.  The hot path is an identity; the
    kernel boundary is kept (per the task), but stripped to the minimal
    gridless VMEM copy with the output aliased onto the input buffer.
    """
    del y, params  # unused in the reference forward
    # NOTE: the reference forward does `print(x.shape)` as a side effect; we
    # intentionally do not print here so the script's only output is KERNEL_OK.
    return pl.pallas_call(
        _identity_kernel,
        out_shape=jax.ShapeDtypeStruct(x.shape, x.dtype),
        # Gridless: whole array lives in VMEM for the single kernel invocation.
        in_specs=[pl.BlockSpec(memory_space=pltpu.MemorySpace.VMEM)],
        out_specs=pl.BlockSpec(memory_space=pltpu.MemorySpace.VMEM),
        # Output aliases input: no separate HBM output allocation / writeback.
        input_output_aliases={0: 0},
    )(x)


def init_params(key):
    """Deterministic init of the (unused-in-forward) Linear(10, 1) params."""
    k_w, k_b = jax.random.split(key)
    # PyTorch Linear default init: U(-1/sqrt(in_features), 1/sqrt(in_features))
    bound = 1.0 / jnp.sqrt(10.0)
    weight = jax.random.uniform(k_w, (1, 10), jnp.float32, -bound, bound)
    bias = jax.random.uniform(k_b, (1,), jnp.float32, -bound, bound)
    return {"weight": weight, "bias": bias}


if __name__ == "__main__":
    key = jax.random.PRNGKey(0)
    k_params, k_x, k_y = jax.random.split(key, 3)

    params = init_params(k_params)

    # Small shapes consistent with the module: x is (batch, 10) per Linear(10,1).
    batch = 8
    x = jax.random.normal(k_x, (batch, 10), dtype=jnp.float32)
    y = jax.random.normal(k_y, (batch, 10), dtype=jnp.float32)

    out = test_model_forward(x, y, params)
    out = jax.block_until_ready(out)

    # Correctness check: forward must be an exact identity on x.
    assert out.shape == x.shape and out.dtype == x.dtype
    assert bool(jnp.all(out == x))

    print("KERNEL_OK")
</pallas_src>

<mosaic_0001>
module attributes {stable_mosaic.version = 11 : i64} {
  func.func @_identity_kernel(%arg0: memref<8x10xf32, #tpu.memory_space<vmem>>, %arg1: memref<8x10xf32, #tpu.memory_space<vmem>>) attributes {dimension_semantics = [], scalar_prefetch = 0 : i64, scratch_operands = 0 : i64, tpu.core_type = #tpu.core_type<tc>} {
    %c0 = arith.constant 0 : index
    %c0_0 = arith.constant 0 : index
    %0 = vector.load %arg0[%c0, %c0_0] : memref<8x10xf32, #tpu.memory_space<vmem>>, vector<8x10xf32>
    %c0_1 = arith.constant 0 : index
    %c0_2 = arith.constant 0 : index
    %1 = vector.load %arg1[%c0_1, %c0_2] : memref<8x10xf32, #tpu.memory_space<vmem>>, vector<8x10xf32>
    tpu.vector_store %arg1[%c0_1, %c0_2], %0 {strides = array<i32>} : memref<8x10xf32, #tpu.memory_space<vmem>>, vector<8x10xf32>,
    return
  }
}

</mosaic_0001>

<llo_original>
// kernel: tpu_custom_call.1
$region0: #{tpu_custom_call.1}
  #allocation0 [shape = 'u32[]', space=smem, size = 0x4, offset = 0x4, fixed_abs, tag = 'smem constant byte address 0x4 - core index']
  #allocation1 [shape = 'u32[144,128]{1,0:T(1,128)}', space=vmem, size = 0x12000, scoped, tag = 'internal scratch']
  %s0 = inlined_call_operand.hbm [shape: f32[8,10], index: 0, kind: input, shape index: {}, may-alias: {0,1}]
  %s1 = inlined_call_operand.hbm [shape: f32[8,10], index: 1, kind: output, shape index: {}, may-alias: {0,1}]
  %s2 = sld [smem:[#allocation0]]
  $region18: #{tpu_custom_call.1} parent=0
    _
  %s4 = ssub.s32 1, %s2
  %s5 = scalar_select 0, %s4, %s2
  $region1: #{tpu_custom_call.1} parent=0
    #allocation2 [shape = 'u8[4096]{0}', space=vmem, size = 0x1000, scoped, tag = 'input window, operand 0, single buffered']
    #allocation3 [shape = 's32[1]{0}', space=sflag, size = 0x4, scoped, tag = 'scoped memory for tpu_custom_call.1']
    #allocation4 [shape = 's32[1]{0}', space=sflag, size = 0x4, scoped, tag = 'scoped memory for tpu_custom_call.1']
    #allocation5 [shape = 'u8[4096]{0}', space=vmem, size = 0x1000, scoped, tag = 'output window, operand 0, single buffered']
    %6 = vsyncpa [#allocation3], 0
    %7 = vsyncpa [#allocation4], 0
    // Predicated region
    $region2: #{tpu_custom_call.1} parent=1 // pred_check
      _
    $region3: #{tpu_custom_call.1} parent=1 // pred_check_branch
      %9 = sbr.rel (0) target = $region5
    $region4: #{tpu_custom_call.1} parent=1 // pred_region
      %s11 = ssub.s32 128, 128
      %12 = vsyncadd [#allocation3], %s11
      %s14 = sshll.u32 [#allocation2], 4
      %s15 = int_to_ptr.vmem [resolvable:$true] %s14
      %17 = dma.hbm_to_vmem [thread:$0]  %s0, 128, %s15, [#allocation3]
    $region5: #{tpu_custom_call.1} parent=1 // pred_fallthru
      _
    // Predicated region
    $region6: #{tpu_custom_call.1} parent=1 // pred_check
      _
    $region7: #{tpu_custom_call.1} parent=1 // pred_check_branch
      %19 = sbr.rel (0) target = $region9
    $region8: #{tpu_custom_call.1} parent=1 // pred_region
      %20 = dma.done [#allocation3], 128
    $region9: #{tpu_custom_call.1} parent=1 // pred_fallthru
      _
    %v21 = vld [vmem:[#allocation2] sm:$0xff]
    %vm22 = vcmask 80896
    %23 = vst.msk [vmem:[#allocation5] sm:$0xff] %vm22, %v21
    // Predicated region
    $region10: #{tpu_custom_call.1} parent=1 // pred_check
      _
    $region11: #{tpu_custom_call.1} parent=1 // pred_check_branch
      %25 = sbr.rel (0) target = $region13
    $region12: #{tpu_custom_call.1} parent=1 // pred_region
      %s27 = ssub.s32 128, 128
      %28 = vsyncadd [#allocation4], %s27
      %s30 = sshll.u32 [#allocation5], 4
      %s31 = int_to_ptr.vmem [resolvable:$true] %s30
      %33 = dma.vmem_to_hbm [thread:$0]  %s31, 128, %s1, [#allocation4]
    $region13: #{tpu_custom_call.1} parent=1 // pred_fallthru
      _
    // Predicated region
    $region14: #{tpu_custom_call.1} parent=1 // pred_check
      _
    $region15: #{tpu_custom_call.1} parent=1 // pred_check_branch
      %35 = sbr.rel (0) target = $region17
    $region16: #{tpu_custom_call.1} parent=1 // pred_region
      %36 = dma.done [#allocation4], 128
    $region17: #{tpu_custom_call.1} parent=1 // pred_fallthru
      _
    %37 = vsyncpa [#allocation3], 1
    %38 = vsyncpa [#allocation4], 1

</llo_original>
